<compile_context>
chip_gen: v5e
topology: v5e:2x2
jax: 0.10.0
libtpu: 0.0.40
codegen_flags: <defaults>
</compile_context>

<pallas_src>
import functools
import math

import jax
import jax.numpy as jnp
from jax import lax
from jax.experimental import pallas as pl
from jax.experimental.pallas import tpu as pltpu


def _pow_nonneg(x, gamma):
    """x**gamma for x >= 0, specialized for integer / half-integer gamma."""
    if gamma == 0:
        return jnp.ones_like(x)
    g2 = 2.0 * float(gamma)
    if g2.is_integer() and 0 < gamma <= 8:
        n_half = int(round(g2))
        n_int, has_half = divmod(n_half, 2)
        out = None
        if n_int > 0:
            out = x
            for _ in range(n_int - 1):
                out = out * x
        if has_half:
            s = jnp.sqrt(x)
            out = s if out is None else out * s
        return out
    # Generic fallback (exp+log on the EUP). Assumes gamma >= 0.
    return jnp.power(x, gamma)


def _focal_kernel(x_ref, t_ref, out_ref, *, gamma, alpha, num_classes,
                  s_valid, tile_r, tiles_per_shard):
    si = pl.program_id(1)          # spatial shard (parallel)
    ji = pl.program_id(2)          # tile within shard (arbitrary / reduction)

    @pl.when(ji == 0)
    def _():
        out_ref[...] = jnp.zeros_like(out_ref)

    x = x_ref[...].astype(jnp.float32)     # (C, tile_r, 128) logits
    t = t_ref[...]                         # (tile_r, 128) int32 class indices

    # log-softmax over the leading (untiled) class axis: elementwise VPU slabs.
    m = jnp.max(x, axis=0, keepdims=True)          # (1, tile_r, 128)
    xs = x - m                                     # (C, tile_r, 128)
    exp_xs = jnp.exp(xs)
    sumexp = jnp.sum(exp_xs, axis=0)               # (tile_r, 128)

    # Fused gather of target-class shifted logit / exp / alpha weight via
    # unrolled per-class selects (C is tiny).  No captured array constants.
    logit_t = xs[0]
    exp_t = exp_xs[0]
    at = None
    if alpha is not None:
        at = jnp.full((tile_r, 128), float(alpha[0]), dtype=jnp.float32)
    for k in range(1, num_classes):
        sel = (t == k)
        logit_t = jnp.where(sel, xs[k], logit_t)
        exp_t = jnp.where(sel, exp_xs[k], exp_t)
        if alpha is not None:
            at = jnp.where(sel, float(alpha[k]), at)

    logpt = logit_t - jnp.log(sumexp)
    pt = exp_t / sumexp            # reuse exp(x_t - m); no second exp needed

    if alpha is not None:
        # NOTE: intentionally matches the PyTorch module exactly — alpha scales
        # log(pt) BEFORE the focal term (quirky, but that's the spec).
        logpt = logpt * at

    loss = -_pow_nonneg(1.0 - pt, gamma) * logpt   # (tile_r, 128)

    # Accumulate into the resident per-(batch, shard) output block.
    g_tile = si * tiles_per_shard + ji             # un-clamped global R-tile
    start = g_tile * (tile_r * 128)
    end = start + tile_r * 128

    @pl.when(end <= s_valid)
    def _():                                       # fully-valid tile: no mask
        out_ref[...] += loss

    @pl.when(end > s_valid)
    def _():                                       # tail / padded / dup tile
        row = lax.broadcasted_iota(jnp.int32, (tile_r, 128), 0)
        lane = lax.broadcasted_iota(jnp.int32, (tile_r, 128), 1)
        idx = start + row * 128 + lane
        out_ref[...] += jnp.where(idx < s_valid, loss, 0.0)


def focal_loss(logits, target, gamma=0.0, alpha=None, size_average=True,
               vmem_block_budget_bytes=32 * 1024 * 1024, _max_tile_r=None):
    """Focal loss matching the PyTorch FocalLoss.forward semantics.

    logits: (B, C, *spatial) or (N, C); target: integer class indices with one
    entry per voxel ((B, *spatial), (B, 1, *spatial), (N,), ...).
    """
    if isinstance(alpha, (float, int)) and not isinstance(alpha, bool):
        alpha = [float(alpha), 1.0 - float(alpha)]
    if alpha is not None:
        alpha = [float(a) for a in alpha]

    if logits.ndim > 2:
        b, c = logits.shape[0], logits.shape[1]
        s = math.prod(logits.shape[2:])
        x3 = jnp.reshape(logits, (b, c, s))        # free reshape of NCHW
        t2 = jnp.reshape(target, (b, s)).astype(jnp.int32)
    else:
        # 2D (N, C) flat-classification path.
        # TODO(synk): this swapaxes materializes one extra HBM copy of the
        # logits (2x HBM traffic); acceptable because this path is rare.
        n, c = logits.shape
        b, s = 1, n
        x3 = jnp.swapaxes(logits, 0, 1)[None]
        t2 = jnp.reshape(target, (1, n)).astype(jnp.int32)

    if alpha is not None:
        assert len(alpha) == c, "alpha must provide one weight per class"

    # Refold the spatial axis into rows of 128 lanes so every vreg is dense.
    s_pad = pl.cdiv(s, 128) * 128
    if s_pad != s:
        # TODO(synk): this pad copies the logits once; it only triggers when
        # the flattened spatial size is not a multiple of 128 (<=127 columns).
        x3 = jnp.pad(x3, ((0, 0), (0, 0), (0, s_pad - s)))
        t2 = jnp.pad(t2, ((0, 0), (0, s_pad - s)))
    r_total = s_pad // 128
    x4 = jnp.reshape(x3, (b, c, r_total, 128))     # free split of last dim
    t3 = jnp.reshape(t2, (b, r_total, 128))

    # --- tile sizing from a VMEM budget ---------------------------------
    # Per 128-lane row of f32:
    #   pipeline blocks: double-buffered logits (c) + targets (1) + resident acc
    #   in-kernel temporaries (xs, exp_xs, a handful of (tile_r,128) planes)
    bytes_per_row = ((2 * (c + 1) + 1) + (2 * c + 6)) * 128 * 4
    tile_r = max(8, (vmem_block_budget_bytes // bytes_per_row) // 8 * 8)
    if b == 1 and r_total >= 16:
        # B == 1 (e.g. 2D path): split S so both v7x TensorCores get a shard.
        r_cap = pl.cdiv(pl.cdiv(r_total, 2), 8) * 8
    else:
        r_cap = pl.cdiv(r_total, 8) * 8
    tile_r = min(tile_r, max(8, r_cap))
    if _max_tile_r is not None:                    # test/debug knob
        tile_r = min(tile_r, max(8, (_max_tile_r // 8) * 8))

    total_r_tiles = pl.cdiv(r_total, tile_r)
    n_shards = 2 if (b == 1 and total_r_tiles >= 2) else 1
    tiles_per_shard = pl.cdiv(total_r_tiles, n_shards)
    grid = (b, n_shards, tiles_per_shard)

    def rb_of(si, ji):
        # Clamp so a shard's overshoot tile re-reads the last valid tile;
        # the kernel's index mask zeroes its contribution.
        return jnp.minimum(si * tiles_per_shard + ji, total_r_tiles - 1)

    kernel = functools.partial(
        _focal_kernel, gamma=gamma, alpha=alpha, num_classes=c,
        s_valid=s, tile_r=tile_r, tiles_per_shard=tiles_per_shard)

    partial_sums = pl.pallas_call(
        kernel,
        out_shape=jax.ShapeDtypeStruct((b * n_shards, tile_r, 128), jnp.float32),
        grid_spec=pltpu.PrefetchScalarGridSpec(
            num_scalar_prefetch=0,
            grid=grid,
            in_specs=[
                pl.BlockSpec((None, c, tile_r, 128),
                             lambda bi, si, ji: (bi, 0, rb_of(si, ji), 0)),
                pl.BlockSpec((None, tile_r, 128),
                             lambda bi, si, ji: (bi, rb_of(si, ji), 0)),
            ],
            out_specs=pl.BlockSpec((None, tile_r, 128),
                                   lambda bi, si, ji: (bi * n_shards + si, 0, 0)),
        ),
        compiler_params=pltpu.CompilerParams(
            dimension_semantics=("parallel", "parallel", "arbitrary"),
            vmem_limit_bytes=48 * 1024 * 1024,   # headroom on v7x's 64 MiB/TC
        ),
    )(x4, t3)

    total = jnp.sum(partial_sums)      # tiny final reduce in plain JAX
    return total / (b * s) if size_average else total


def _reference(logits, target, gamma=0.0, alpha=None, size_average=True):
    c = logits.shape[1]
    x2 = jnp.reshape(jnp.moveaxis(logits, 1, -1), (-1, c)).astype(jnp.float32)
    t = jnp.reshape(target, (-1,)).astype(jnp.int32)
    logp = jax.nn.log_softmax(x2, axis=-1)
    logpt = jnp.take_along_axis(logp, t[:, None], axis=-1)[:, 0]
    pt = jnp.exp(logpt)
    if isinstance(alpha, (float, int)) and not isinstance(alpha, bool):
        alpha = [float(alpha), 1.0 - float(alpha)]
    if alpha is not None:
        a = jnp.asarray(alpha, jnp.float32)
        logpt = logpt * a[t]
    loss = -((1.0 - pt) ** gamma) * logpt
    return jnp.mean(loss) if size_average else jnp.sum(loss)


if __name__ == "__main__":
    key = jax.random.PRNGKey(0)
    k1, k2, k3, k4, k5, k6 = jax.random.split(key, 6)

    # 1) 4D segmentation-style input, module defaults (gamma=0, alpha=None).
    B, C, H, W = 2, 4, 16, 16
    logits = jax.random.normal(k1, (B, C, H, W), dtype=jnp.float32)
    target = jax.random.randint(k2, (B, H, W), 0, C, dtype=jnp.int32)
    l0 = jax.block_until_ready(focal_loss(logits, target))
    r0 = _reference(logits, target)
    assert jnp.allclose(l0, r0, rtol=1e-5, atol=1e-5), (l0, r0)

    # 2) Focal config: gamma=2 with a per-class alpha list.
    alpha = [0.25, 0.75, 0.5, 0.5]
    l2 = jax.block_until_ready(focal_loss(logits, target, gamma=2.0, alpha=alpha))
    r2 = _reference(logits, target, gamma=2.0, alpha=alpha)
    assert jnp.allclose(l2, r2, rtol=1e-5, atol=1e-5), (l2, r2)

    # 3) Spatial size not a multiple of 128 (exercises the tail mask),
    #    scalar alpha (-> [a, 1-a]) and sum reduction.
    B3, C3, H3, W3 = 2, 2, 11, 13
    lg3 = jax.random.normal(k3, (B3, C3, H3, W3), dtype=jnp.float32)
    tg3 = jax.random.randint(k4, (B3, H3, W3), 0, C3, dtype=jnp.int32)
    l3 = jax.block_until_ready(
        focal_loss(lg3, tg3, gamma=2.0, alpha=0.25, size_average=False))
    r3 = _reference(lg3, tg3, gamma=2.0, alpha=0.25, size_average=False)
    assert jnp.allclose(l3, r3, rtol=1e-5, atol=1e-5), (l3, r3)

    # 4) B=1 input: exercises the 2-shard spatial split (v7x dual TensorCore)
    #    including the clamped duplicate tile when the tile count is odd.
    B4, C4, H4, W4 = 1, 4, 48, 64
    lg4 = jax.random.normal(k5, (B4, C4, H4, W4), dtype=jnp.float32)
    tg4 = jax.random.randint(k6, (B4, H4, W4), 0, C4, dtype=jnp.int32)
    l4 = jax.block_until_ready(focal_loss(lg4, tg4, gamma=2.0, _max_tile_r=8))
    r4 = _reference(lg4, tg4, gamma=2.0)
    assert jnp.allclose(l4, r4, rtol=1e-5, atol=1e-5), (l4, r4)

    print("KERNEL_OK")
</pallas_src>

<mosaic_0001>
module attributes {stable_mosaic.version = 11 : i64} {
  func.func @_focal_kernel(%arg0: i32, %arg1: i32, %arg2: i32, %arg3: memref<1x4x8x128xf32, #tpu.memory_space<vmem>>, %arg4: memref<1x8x128xi32, #tpu.memory_space<vmem>>, %arg5: memref<1x8x128xf32, #tpu.memory_space<vmem>>) attributes {dimension_semantics = [#tpu.dimension_semantics<parallel>, #tpu.dimension_semantics<parallel>, #tpu.dimension_semantics<arbitrary>], iteration_bounds = array<i64: 2, 1, 1>, scalar_prefetch = 0 : i64, scratch_operands = 0 : i64, tpu.core_type = #tpu.core_type<tc>, window_params = [{transform_indices = @transform_0, window_bounds = array<i64: 1, 4, 8, 128>}, {transform_indices = @transform_1, window_bounds = array<i64: 1, 8, 128>}, {transform_indices = @transform_2, window_bounds = array<i64: 1, 8, 128>}]} {
    %c0_i32 = arith.constant 0 : i32
    %0 = arith.cmpi eq, %arg2, %c0_i32 : i32
    %1 = arith.extui %0 : i1 to i32
    %c0_i32_0 = arith.constant 0 : i32
    %2 = arith.cmpi ne, %1, %c0_i32_0 : i32
    scf.if %2 {
      %cst_15 = arith.constant 0.000000e+00 : f32
      %46 = vector.broadcast %cst_15 : f32 to vector<8x128xf32>
      %c0_16 = arith.constant 0 : index
      %c0_17 = arith.constant 0 : index
      %c0_18 = arith.constant 0 : index
      %47 = vector.load %arg5[%c0_16, %c0_17, %c0_18] : memref<1x8x128xf32, #tpu.memory_space<vmem>>, vector<1x8x128xf32>
      %48 = vector.shape_cast %47 : vector<1x8x128xf32> to vector<8x128xf32>
      %49 = vector.shape_cast %46 : vector<8x128xf32> to vector<1x8x128xf32>
      tpu.vector_store %arg5[%c0_16, %c0_17, %c0_18], %49 {strides = array<i32>} : memref<1x8x128xf32, #tpu.memory_space<vmem>>, vector<1x8x128xf32>,
    } else {
    }
    %c0 = arith.constant 0 : index
    %c0_1 = arith.constant 0 : index
    %c0_2 = arith.constant 0 : index
    %c0_3 = arith.constant 0 : index
    %3 = vector.load %arg3[%c0, %c0_1, %c0_2, %c0_3] : memref<1x4x8x128xf32, #tpu.memory_space<vmem>>, vector<1x4x8x128xf32>
    %4 = vector.shape_cast %3 : vector<1x4x8x128xf32> to vector<4x8x128xf32>
    %c0_4 = arith.constant 0 : index
    %c0_5 = arith.constant 0 : index
    %c0_6 = arith.constant 0 : index
    %5 = vector.load %arg4[%c0_4, %c0_5, %c0_6] : memref<1x8x128xi32, #tpu.memory_space<vmem>>, vector<1x8x128xi32>
    %6 = vector.shape_cast %5 : vector<1x8x128xi32> to vector<8x128xi32>
    %cst = arith.constant dense<0xFF800000> : vector<8x128xf32>
    %7 = vector.multi_reduction <maximumf>, %4, %cst [0] : vector<4x8x128xf32> to vector<8x128xf32>
    %8 = vector.shape_cast %7 : vector<8x128xf32> to vector<1x8x128xf32>
    %9 = vector.broadcast %8 : vector<1x8x128xf32> to vector<4x8x128xf32>
    %10 = arith.subf %4, %9 : vector<4x8x128xf32>
    %11 = math.exp %10 : vector<4x8x128xf32>
    %cst_7 = arith.constant dense<0.000000e+00> : vector<8x128xf32>
    %12 = vector.multi_reduction <add>, %11, %cst_7 [0] : vector<4x8x128xf32> to vector<8x128xf32>
    %13 = vector.extract_strided_slice %10 {offsets = [0, 0, 0], sizes = [1, 8, 128], strides = [1, 1, 1]} : vector<4x8x128xf32> to vector<1x8x128xf32>
    %14 = vector.shape_cast %13 : vector<1x8x128xf32> to vector<8x128xf32>
    %c1_i32 = arith.constant 1 : i32
    %15 = vector.broadcast %c1_i32 : i32 to vector<8x128xi32>
    %16 = arith.cmpi eq, %6, %15 : vector<8x128xi32>
    %17 = vector.extract_strided_slice %10 {offsets = [1, 0, 0], sizes = [1, 8, 128], strides = [1, 1, 1]} : vector<4x8x128xf32> to vector<1x8x128xf32>
    %18 = vector.shape_cast %17 : vector<1x8x128xf32> to vector<8x128xf32>
    %19 = arith.select %16, %18, %14 : vector<8x128xi1>, vector<8x128xf32>
    %c2_i32 = arith.constant 2 : i32
    %20 = vector.broadcast %c2_i32 : i32 to vector<8x128xi32>
    %21 = arith.cmpi eq, %6, %20 : vector<8x128xi32>
    %22 = vector.extract_strided_slice %10 {offsets = [2, 0, 0], sizes = [1, 8, 128], strides = [1, 1, 1]} : vector<4x8x128xf32> to vector<1x8x128xf32>
    %23 = vector.shape_cast %22 : vector<1x8x128xf32> to vector<8x128xf32>
    %24 = arith.select %21, %23, %19 : vector<8x128xi1>, vector<8x128xf32>
    %c3_i32 = arith.constant 3 : i32
    %25 = vector.broadcast %c3_i32 : i32 to vector<8x128xi32>
    %26 = arith.cmpi eq, %6, %25 : vector<8x128xi32>
    %27 = vector.extract_strided_slice %10 {offsets = [3, 0, 0], sizes = [1, 8, 128], strides = [1, 1, 1]} : vector<4x8x128xf32> to vector<1x8x128xf32>
    %28 = vector.shape_cast %27 : vector<1x8x128xf32> to vector<8x128xf32>
    %29 = arith.select %26, %28, %24 : vector<8x128xi1>, vector<8x128xf32>
    %30 = math.log %12 : vector<8x128xf32>
    %31 = arith.subf %29, %30 : vector<8x128xf32>
    %cst_8 = arith.constant 1.000000e+00 : f32
    %32 = vector.broadcast %cst_8 : f32 to vector<8x128xf32>
    %cst_9 = arith.constant 0.000000e+00 : f32
    %33 = vector.broadcast %cst_9 : f32 to vector<8x128xf32>
    %34 = arith.subf %33, %32 : vector<8x128xf32>
    %35 = arith.mulf %34, %31 : vector<8x128xf32>
    %c1_i32_10 = arith.constant 1 : i32
    %36 = arith.muli %arg1, %c1_i32_10 : i32
    %37 = arith.addi %36, %arg2 : i32
    %c1024_i32 = arith.constant 1024 : i32
    %38 = arith.muli %37, %c1024_i32 : i32
    %c1024_i32_11 = arith.constant 1024 : i32
    %39 = arith.addi %38, %c1024_i32_11 : i32
    %c256_i32 = arith.constant 256 : i32
    %40 = arith.cmpi sle, %39, %c256_i32 : i32
    %41 = arith.extui %40 : i1 to i32
    %c0_i32_12 = arith.constant 0 : i32
    %42 = arith.cmpi ne, %41, %c0_i32_12 : i32
    scf.if %42 {
      %c0_15 = arith.constant 0 : index
      %c0_16 = arith.constant 0 : index
      %c0_17 = arith.constant 0 : index
      %46 = vector.load %arg5[%c0_15, %c0_16, %c0_17] : memref<1x8x128xf32, #tpu.memory_space<vmem>>, vector<1x8x128xf32>
      %47 = vector.shape_cast %46 : vector<1x8x128xf32> to vector<8x128xf32>
      %48 = arith.addf %47, %35 : vector<8x128xf32>
      %c0_18 = arith.constant 0 : index
      %c0_19 = arith.constant 0 : index
      %c0_20 = arith.constant 0 : index
      %49 = vector.load %arg5[%c0_18, %c0_19, %c0_20] : memref<1x8x128xf32, #tpu.memory_space<vmem>>, vector<1x8x128xf32>
      %50 = vector.shape_cast %49 : vector<1x8x128xf32> to vector<8x128xf32>
      %51 = vector.shape_cast %48 : vector<8x128xf32> to vector<1x8x128xf32>
      tpu.vector_store %arg5[%c0_18, %c0_19, %c0_20], %51 {strides = array<i32>} : memref<1x8x128xf32, #tpu.memory_space<vmem>>, vector<1x8x128xf32>,
    } else {
    }
    %c256_i32_13 = arith.constant 256 : i32
    %43 = arith.cmpi sgt, %39, %c256_i32_13 : i32
    %44 = arith.extui %43 : i1 to i32
    %c0_i32_14 = arith.constant 0 : i32
    %45 = arith.cmpi ne, %44, %c0_i32_14 : i32
    scf.if %45 {
      %46 = tpu.iota {dimensions = array<i32: 0>} : vector<8x128xi32>
      %47 = tpu.iota {dimensions = array<i32: 1>} : vector<8x128xi32>
      %c128_i32 = arith.constant 128 : i32
      %48 = vector.broadcast %c128_i32 : i32 to vector<8x128xi32>
      %49 = arith.muli %46, %48 : vector<8x128xi32>
      %50 = vector.broadcast %38 : i32 to vector<8x128xi32>
      %51 = arith.addi %50, %49 : vector<8x128xi32>
      %52 = arith.addi %51, %47 : vector<8x128xi32>
      %c0_15 = arith.constant 0 : index
      %c0_16 = arith.constant 0 : index
      %c0_17 = arith.constant 0 : index
      %53 = vector.load %arg5[%c0_15, %c0_16, %c0_17] : memref<1x8x128xf32, #tpu.memory_space<vmem>>, vector<1x8x128xf32>
      %54 = vector.shape_cast %53 : vector<1x8x128xf32> to vector<8x128xf32>
      %c256_i32_18 = arith.constant 256 : i32
      %55 = vector.broadcast %c256_i32_18 : i32 to vector<8x128xi32>
      %56 = arith.cmpi slt, %52, %55 : vector<8x128xi32>
      %cst_19 = arith.constant 0.000000e+00 : f32
      %57 = vector.broadcast %cst_19 : f32 to vector<8x128xf32>
      %58 = arith.select %56, %35, %57 : vector<8x128xi1>, vector<8x128xf32>
      %59 = arith.addf %54, %58 : vector<8x128xf32>
      %c0_20 = arith.constant 0 : index
      %c0_21 = arith.constant 0 : index
      %c0_22 = arith.constant 0 : index
      %60 = vector.load %arg5[%c0_20, %c0_21, %c0_22] : memref<1x8x128xf32, #tpu.memory_space<vmem>>, vector<1x8x128xf32>
      %61 = vector.shape_cast %60 : vector<1x8x128xf32> to vector<8x128xf32>
      %62 = vector.shape_cast %59 : vector<8x128xf32> to vector<1x8x128xf32>
      tpu.vector_store %arg5[%c0_20, %c0_21, %c0_22], %62 {strides = array<i32>} : memref<1x8x128xf32, #tpu.memory_space<vmem>>, vector<1x8x128xf32>,
    } else {
    }
    return
  }
  func.func @transform_0(%arg0: i32, %arg1: i32, %arg2: i32) -> (i32, i32, i32, i32) {
    %c1_i32 = arith.constant 1 : i32
    %0 = arith.muli %arg1, %c1_i32 : i32
    %1 = arith.addi %0, %arg2 : i32
    %c0_i32 = arith.constant 0 : i32
    %2 = arith.minsi %1, %c0_i32 : i32
    %c0_i32_0 = arith.constant 0 : i32
    %c0_i32_1 = arith.constant 0 : i32
    %c0_i32_2 = arith.constant 0 : i32
    return %arg0, %c0_i32_0, %2, %c0_i32_1 : i32, i32, i32, i32
  }
  func.func @transform_1(%arg0: i32, %arg1: i32, %arg2: i32) -> (i32, i32, i32) {
    %c1_i32 = arith.constant 1 : i32
    %0 = arith.muli %arg1, %c1_i32 : i32
    %1 = arith.addi %0, %arg2 : i32
    %c0_i32 = arith.constant 0 : i32
    %2 = arith.minsi %1, %c0_i32 : i32
    %c0_i32_0 = arith.constant 0 : i32
    %c0_i32_1 = arith.constant 0 : i32
    return %arg0, %2, %c0_i32_0 : i32, i32, i32
  }
  func.func @transform_2(%arg0: i32, %arg1: i32, %arg2: i32) -> (i32, i32, i32) {
    %c1_i32 = arith.constant 1 : i32
    %0 = arith.muli %arg0, %c1_i32 : i32
    %1 = arith.addi %0, %arg1 : i32
    %c0_i32 = arith.constant 0 : i32
    %c0_i32_0 = arith.constant 0 : i32
    %c0_i32_1 = arith.constant 0 : i32
    return %1, %c0_i32, %c0_i32_0 : i32, i32, i32
  }
}

</mosaic_0001>

<llo_original>
// kernel: tpu_custom_call.1
$region0: #{tpu_custom_call.1}
  #allocation0 [shape = 'u32[]', space=smem, size = 0x4, offset = 0x4, fixed_abs, tag = 'smem constant byte address 0x4 - core index']
  #allocation1 [shape = 'u32[72,128]{1,0:T(1,128)}', space=vmem, size = 0x9000, scoped, tag = 'internal scratch']
  #allocation8 [shape = 's32[]', space=sflag, size = 0x4, offset = 0, fixed_abs, tag = 'sflag constant byte address 0x0 - dummy sync flag']
  %s0 = inlined_call_operand.hbm [shape: f32[2,4,2,128], index: 0, kind: input, shape index: {}]
  %s1 = inlined_call_operand.hbm [shape: s32[2,2,128], index: 1, kind: input, shape index: {}]
  %s2 = inlined_call_operand.hbm [shape: f32[2,8,128], index: 2, kind: output, shape index: {}]
  %s3 = sld [smem:[#allocation0]]
  $region61: #{tpu_custom_call.1} parent=0
    _
  %s5 = ssub.s32 1, %s3
  %s6 = scalar_select 0, %s5, %s3
  $region1: #{tpu_custom_call.1} parent=0
    #allocation2 [shape = 'u8[32768]{0}', space=vmem, size = 0x8000, scoped, tag = 'input window, operand 0']
    #allocation3 [shape = 's32[2]{0}', space=sflag, size = 0x8, scoped, tag = 'scoped memory for tpu_custom_call.1']
    #allocation4 [shape = 's32[2]{0}', space=sflag, size = 0x8, scoped, tag = 'scoped memory for tpu_custom_call.1']
    #allocation5 [shape = 'u8[8192]{0}', space=vmem, size = 0x2000, scoped, tag = 'input window, operand 1']
    #allocation6 [shape = 's32[2]{0}', space=sflag, size = 0x8, scoped, tag = 'scoped memory for tpu_custom_call.1']
    #allocation7 [shape = 'u8[8192]{0}', space=vmem, size = 0x2000, scoped, tag = 'output window, operand 0']
    %7 = vsyncpa [#allocation3], 0
    %s8 = scalar_lea.sflag [#allocation3], 1
    %9 = vsyncpa %s8, 0
    %10 = vsyncpa [#allocation6], 0
    %s11 = scalar_lea.sflag [#allocation6], 1
    %12 = vsyncpa %s11, 0
    %13 = vsyncpa [#allocation4], 0
    %s14 = scalar_lea.sflag [#allocation4], 1
    %15 = vsyncpa %s14, 0
    loop: start=0, step=1, limit=4
    $region2: #{tpu_custom_call.1} parent=1 // loop_pre_header
      _
    $region3: #{tpu_custom_call.1} parent=1 // loop_header
      %s17 = sphi 0, %s21
      %p18 = scmp.ge.s32.totalorder %s17, 4
      %s24 = sphi 0, %s43
      %s25 = sphi 0, %s39
      %s26 = sphi 0, %s35
      %s27 = sphi 0, %s24
      %s28 = sphi 0, %s25
      %s29 = sphi 0, %s26
      %s30 = sphi 0, %s27
      %s31 = sphi 0, %s28
      %s32 = sphi 0, %s29
      %s54 = sphi 0, %s56
      %s57 = sphi 0, %s54
      %s58 = sphi 0, %s57
      %s74 = sphi 0, %s58
      %s88 = sphi 0, %s90
      %s91 = sphi 0, %s88
      %s92 = sphi 0, %s91
      %s108 = sphi 0, %s92
      %s116 = sphi 0, %s118
      %s119 = sphi 0, %s116
      %s120 = sphi 0, %s119
      %s136 = sphi 0, %s120
    $region4: #{tpu_custom_call.1} parent=1 // loop_header_branch
      %20 = sbr.rel (%p18) target = $region8
    $region5: #{tpu_custom_call.1} parent=1 // loop_body
      %s22 = ssub.s32 %s17, 1
      %s23 = ssub.s32 %s17, 2
      %s33 = sadd.s32 1, %s26
      %p34 = scmp.ge.s32.totalorder %s33, 1
      %s35 = scalar_select %p34, 0, %s33
      %s36 = sadd.s32 1, %s25
      %s37 = scalar_select %p34, %s36, %s25
      %p38 = scmp.ge.s32.totalorder %s37, 1
      %s39 = scalar_select %p38, 0, %s37
      %s40 = sadd.s32 1, %s24
      %s41 = scalar_select %p38, %s40, %s24
      %p42 = scmp.ge.s32.totalorder %s41, 2
      %s43 = scalar_select %p42, 0, %s41
      %s44 = sadd.s32 %s25, %s26
      %p45 = scmp.lt.s32.totalorder %s44, 0
      %s46 = scalar_select %p45, %s44, 0
      %s47 = sadd.s32 %s39, %s35
      %p48 = scmp.lt.s32.totalorder %s47, 0
      %s49 = scalar_select %p48, %s47, 0
      %s50 = ssub.s32 %s24, %s43
      %s51 = ssub.s32 %s46, %s49
      %s52 = sor.u32 %s50, %s51
      %p53 = scmp.eq.s32.totalorder %s52, 0
      %s55 = sadd.s32 %s54, 1
      %s56 = scalar_select %p53, %s54, %s55
      %p59 = pneg %p53
      %p60 = scmp.eq.s32.totalorder %s17, 1
      %p61 = por %p59, %p60
      %p62 = scmp.ne.s32.totalorder %s54, %s57
      %p63 = scmp.eq.s32.totalorder %s17, 0
      %p64 = por %p62, %p63
      %p65 = scmp.ne.s32.totalorder %s54, %s57
      %p66 = scmp.eq.s32.totalorder %s22, 1
      %p67 = por %p65, %p66
      %p68 = scmp.ne.s32.totalorder %s57, %s58
      %p69 = scmp.eq.s32.totalorder %s22, 0
      %p70 = por %p68, %p69
      %p71 = scmp.ne.s32.totalorder %s57, %s58
      %p72 = scmp.eq.s32.totalorder %s23, 1
      %p73 = por %p71, %p72
      %p75 = scmp.ne.s32.totalorder %s58, %s74
      %p76 = scmp.eq.s32.totalorder %s23, 0
      %p77 = por %p75, %p76
      %s78 = sadd.s32 %s25, %s26
      %p79 = scmp.lt.s32.totalorder %s78, 0
      %s80 = scalar_select %p79, %s78, 0
      %s81 = sadd.s32 %s39, %s35
      %p82 = scmp.lt.s32.totalorder %s81, 0
      %s83 = scalar_select %p82, %s81, 0
      %s84 = ssub.s32 %s24, %s43
      %s85 = ssub.s32 %s80, %s83
      %s86 = sor.u32 %s84, %s85
      %p87 = scmp.eq.s32.totalorder %s86, 0
      %s89 = sadd.s32 %s88, 1
      %s90 = scalar_select %p87, %s88, %s89
      %p93 = pneg %p87
      %p94 = scmp.eq.s32.totalorder %s17, 1
      %p95 = por %p93, %p94
      %p96 = scmp.ne.s32.totalorder %s88, %s91
      %p97 = scmp.eq.s32.totalorder %s17, 0
      %p98 = por %p96, %p97
      %p99 = scmp.ne.s32.totalorder %s88, %s91
      %p100 = scmp.eq.s32.totalorder %s22, 1
      %p101 = por %p99, %p100
      %p102 = scmp.ne.s32.totalorder %s91, %s92
      %p103 = scmp.eq.s32.totalorder %s22, 0
      %p104 = por %p102, %p103
      %p105 = scmp.ne.s32.totalorder %s91, %s92
      %p106 = scmp.eq.s32.totalorder %s23, 1
      %p107 = por %p105, %p106
      %p109 = scmp.ne.s32.totalorder %s92, %s108
      %p110 = scmp.eq.s32.totalorder %s23, 0
      %p111 = por %p109, %p110
      %s112 = sadd.s32 %s24, %s25
      %s113 = sadd.s32 %s43, %s39
      %s114 = ssub.s32 %s112, %s113
      %p115 = scmp.eq.s32.totalorder %s114, 0
      %s117 = sadd.s32 %s116, 1
      %s118 = scalar_select %p115, %s116, %s117
      %p121 = pneg %p115
      %p122 = scmp.eq.s32.totalorder %s17, 1
      %p123 = por %p121, %p122
      %p124 = scmp.ne.s32.totalorder %s116, %s119
      %p125 = scmp.eq.s32.totalorder %s17, 0
      %p126 = por %p124, %p125
      %p127 = scmp.ne.s32.totalorder %s116, %s119
      %p128 = scmp.eq.s32.totalorder %s22, 1
      %p129 = por %p127, %p128
      %p130 = scmp.ne.s32.totalorder %s119, %s120
      %p131 = scmp.eq.s32.totalorder %s22, 0
      %p132 = por %p130, %p131
      %p133 = scmp.ne.s32.totalorder %s119, %s120
      %p134 = scmp.eq.s32.totalorder %s23, 1
      %p135 = por %p133, %p134
      %p137 = scmp.ne.s32.totalorder %s120, %s136
      %p138 = scmp.eq.s32.totalorder %s23, 0
      %p139 = por %p137, %p138
      %p140 = scmp.le.s32.totalorder 1, %s17
      %p141 = scmp.lt.s32.totalorder %s17, 3
      %p142 = pnand %p140, %p141
      %p143 = pneg %p142
      // Predicated region
      $region9: #{tpu_custom_call.1} parent=5 // pred_check
        _
      $region10: #{tpu_custom_call.1} parent=5 // pred_check_branch
        %145 = sbr.rel (%p142) target = $region12
      $region11: #{tpu_custom_call.1} parent=5 // pred_region
        %s146 = ssub.s32 %s17, 1
      $region12: #{tpu_custom_call.1} parent=5 // pred_fallthru
        _
      %p147 = scmp.lt.s32.totalorder %s17, 2
      // Predicated region
      $region13: #{tpu_custom_call.1} parent=5 // pred_check
        %p148 = pneg %p147
      $region14: #{tpu_custom_call.1} parent=5 // pred_check_branch
        %150 = sbr.rel (%p148) target = $region16
      $region15: #{tpu_custom_call.1} parent=5 // pred_region
        // Predicated region
        $region17: #{tpu_custom_call.1} parent=15 // pred_check
          %p151 = pneg %p64
        $region18: #{tpu_custom_call.1} parent=15 // pred_check_branch
          %153 = sbr.rel (%p151) target = $region20
        $region19: #{tpu_custom_call.1} parent=15 // pred_region
          #allocation9 [shape = 'u32[6]{0}', space=smem, size = 0x18, scoped, tag = 'DMA stride descriptor']
          %s154 = sand.u32 %s54, 1
          %s155 = scalar_lea.sflag [#allocation3], %s154
          %s156 = sand.u32 %s54, 1
          %s157 = smul.addr %s156, 32
          %s158 = scalar_lea.vmem [#allocation2], %s157
          %s159 = sadd.s32 %s25, %s26
          %p160 = scmp.lt.s32.totalorder %s159, 0
          %s161 = scalar_select %p160, %s159, 0
          %s162 = smul.u32 4, %s161
          %s163 = ssub.s32 1, %s162
          %s164 = smul.u32 8, %s163
          %s165 = ssub.s32 32, %s164
          %s166 = sshll.u32 %s165, 4
          %167 = vsyncadd %s155, %s166
          %p168 = scmp.ne.s32.totalorder 0, %s164
          %s169 = smul.addr %s24, 4
          %s170 = sadd.s32 %s162, %s169
          %s171 = smul.addr %s170, 2
          %s172 = scalar_lea.hbm %s0, %s171
          %s173 = smul.u32 2, %s163
          %s174 = smul.u32 %s173, 4
          %s176 = sshll.u32 1, 14
          %s177 = sxor.u32 4294967295, %s176
          %s179 = sld [smem:[#allocation0]]
          %s180 = sadd.s32 2, %s179
          %s182 = sshll.u32 7, 26
          %s183 = sxor.u32 4294967295, %s182
          %s184 = sand.u32 0, %s183
          %s185 = sshll.u32 %s180, 26
          %s186 = sor.u32 %s184, %s185
          %s187 = sshll.u32 %s172, 4
          %s188 = int_to_ptr.hbm [resolvable:$true] %s187
          %s189 = sshll.u32 %s158, 4
          %s190 = int_to_ptr.vmem [resolvable:$true] %s189
          %s191 = sshll.u32 %s174, 4
          %196 = sst [smem:[#allocation9]] 32
          %s197 = scalar_lea.smem [#allocation9], 1
          %198 = sst [smem:[%s197]] 128
          %s199 = scalar_lea.smem [#allocation9], 2
          %200 = sst [smem:[%s199]] %s163
          %s201 = scalar_lea.smem [#allocation9], 3
          %202 = sst [smem:[%s201]] 32
          %s203 = scalar_lea.smem [#allocation9], 4
          %204 = sst [smem:[%s203]] 32
          %s205 = scalar_lea.smem [#allocation9], 5
          %206 = sst [smem:[%s205]] 2
          %208 = dma.general (%p168), %s188, %s191, %s190, %s155, [#allocation8], [#allocation9], %s186, 0
        $region20: #{tpu_custom_call.1} parent=15 // pred_fallthru
          _
        // Predicated region
        $region21: #{tpu_custom_call.1} parent=15 // pred_check
          %p209 = pneg %p98
        $region22: #{tpu_custom_call.1} parent=15 // pred_check_branch
          %211 = sbr.rel (%p209) target = $region24
        $region23: #{tpu_custom_call.1} parent=15 // pred_region
          %s212 = sand.u32 %s88, 1
          %s213 = scalar_lea.sflag [#allocation6], %s212
          %s214 = sand.u32 %s88, 1
          %s215 = smul.addr %s214, 8
          %s216 = scalar_lea.vmem [#allocation5], %s215
          %s217 = sadd.s32 %s25, %s26
          %p218 = scmp.lt.s32.totalorder %s217, 0
          %s219 = scalar_select %p218, %s217, 0
          %s220 = smul.u32 4, %s219
          %s221 = ssub.s32 1, %s220
          %s222 = smul.u32 2, %s221
          %s223 = ssub.s32 8, %s222
          %s224 = sshll.u32 %s223, 4
          %225 = vsyncadd %s213, %s224
          %p226 = scmp.ne.s32.totalorder 0, %s222
          %s227 = sadd.s32 %s220, %s24
          %s228 = smul.addr %s227, 2
          %s229 = scalar_lea.hbm %s1, %s228
          %s230 = smul.u32 2, %s221
          %s231 = sshll.u32 %s229, 4
          %s232 = int_to_ptr.hbm [resolvable:$true] %s231
          %s233 = sshll.u32 %s216, 4
          %s234 = int_to_ptr.vmem [resolvable:$true] %s233
          %s235 = sshll.u32 %s230, 4
          %239 = dma.hbm_to_vmem [thread:$0]  (%p226), %s232, %s235, %s234, %s213, 32, 32, 2
        $region24: #{tpu_custom_call.1} parent=15 // pred_fallthru
          _
      $region16: #{tpu_custom_call.1} parent=5 // pred_fallthru
        _
      %p240 = scmp.le.s32.totalorder 1, %s17
      %p241 = scmp.lt.s32.totalorder %s17, 3
      %p242 = pnand %p240, %p241
      %p243 = pneg %p242
      // Predicated region
      $region25: #{tpu_custom_call.1} parent=5 // pred_check
        _
      $region26: #{tpu_custom_call.1} parent=5 // pred_check_branch
        %245 = sbr.rel (%p242) target = $region28
      $region27: #{tpu_custom_call.1} parent=5 // pred_region
        %s246 = ssub.s32 %s17, 1
        %s247 = sand.u32 %s57, 1
        %s248 = scalar_lea.sflag [#allocation3], %s247
        %s249 = sand.u32 %s57, 1
        %s250 = smul.addr %s249, 32
        %s251 = scalar_lea.vmem [#allocation2], %s250
        // Predicated region
        $region29: #{tpu_custom_call.1} parent=27 // pred_check
          %p252 = pneg %p70
        $region30: #{tpu_custom_call.1} parent=27 // pred_check_branch
          %254 = sbr.rel (%p252) target = $region32
        $region31: #{tpu_custom_call.1} parent=27 // pred_region
          %256 = dma.done %s248, 512
        $region32: #{tpu_custom_call.1} parent=27 // pred_fallthru
          _
        %s257 = sand.u32 %s91, 1
        %s258 = scalar_lea.sflag [#allocation6], %s257
        %s259 = sand.u32 %s91, 1
        %s260 = smul.addr %s259, 8
        %s261 = scalar_lea.vmem [#allocation5], %s260
        // Predicated region
        $region33: #{tpu_custom_call.1} parent=27 // pred_check
          %p262 = pneg %p104
        $region34: #{tpu_custom_call.1} parent=27 // pred_check_branch
          %264 = sbr.rel (%p262) target = $region36
        $region35: #{tpu_custom_call.1} parent=27 // pred_region
          %266 = dma.done %s258, 128
        $region36: #{tpu_custom_call.1} parent=27 // pred_fallthru
          _
        %s267 = sand.u32 %s57, 1
        %s268 = scalar_lea.sflag [#allocation3], %s267
        %s269 = sand.u32 %s57, 1
        %s270 = smul.addr %s269, 32
        %s271 = scalar_lea.vmem [#allocation2], %s270
        %p272 = pneg %p70
        %p273 = pneg %p67
        %s274 = sand.u32 %s91, 1
        %s275 = scalar_lea.sflag [#allocation6], %s274
        %s276 = sand.u32 %s91, 1
        %s277 = smul.addr %s276, 8
        %s278 = scalar_lea.vmem [#allocation5], %s277
        %p279 = pneg %p104
        %p280 = pneg %p101
        %p281 = pneg %p132
        %p282 = pneg %p129
        %s283 = sand.u32 %s119, 1
        %s284 = scalar_lea.sflag [#allocation4], %s283
        %s285 = sand.u32 %s119, 1
        %s286 = smul.addr %s285, 8
        %s287 = scalar_lea.vmem [#allocation7], %s286
        %s288 = sadd.s32 %s28, %s29
        %p289 = scmp.lt.s32.totalorder %s288, 0
        %s290 = scalar_select %p289, %s288, 0
        %s291 = smul.u32 4, %s290
        %s292 = ssub.s32 1, %s291
        %s293 = smul.u32 8, %s292
        %s294 = sadd.s32 %s28, %s29
        %p295 = scmp.lt.s32.totalorder %s294, 0
        %s296 = scalar_select %p295, %s294, 0
        %s297 = smul.u32 4, %s296
        %s298 = ssub.s32 1, %s297
        %s299 = smul.u32 2, %s298
        %s300 = sadd.s32 %s27, %s28
        %p301 = scmp.eq.s32.totalorder %s29, 0
        // Predicated region
        $region37: #{tpu_custom_call.1} parent=27 // pred_check
          %p302 = pneg %p301
        $region38: #{tpu_custom_call.1} parent=27 // pred_check_branch
          %304 = sbr.rel (%p302) target = $region40
        $region39: #{tpu_custom_call.1} parent=27 // pred_region
          %305 = vst [vmem:[%s287] sm:$0xff] 0.0
        $region40: #{tpu_custom_call.1} parent=27 // pred_fallthru
          _
        %v306 = vld [vmem:[%s251] sm:$0xff]
        %v307 = vld [vmem:[%s251 + $0x8] sm:$0xff]
        %v308 = vld [vmem:[%s251 + $0x10] sm:$0xff]
        %v309 = vld [vmem:[%s251 + $0x18] sm:$0xff]
        %v310 = vld [vmem:[%s261] sm:$0xff]
        %v311 = vmax.f32 %v306, %v307
        %v312 = vmax.f32 %v308, %v309
        %v313 = vmax.f32 %v311, %v312
        %v314 = vsub.f32 %v306, %v313
        %v315 = vsub.f32 %v307, %v313
        %v316 = vsub.f32 %v308, %v313
        %v317 = vsub.f32 %v309, %v313
        %v318 = vmul.f32 %v314, 1.442695
        %v319 = vpow.pop %v318
        %v320 = vmul.f32 %v315, 1.442695
        %v321 = vpow.pop %v320
        %v322 = vmul.f32 %v316, 1.442695
        %v323 = vpow.pop %v322
        %v324 = vmul.f32 %v317, 1.442695
        %v325 = vpow.pop %v324
        %v326 = vadd.f32 %v319, %v321
        %v327 = vadd.f32 %v326, %v323
        %v328 = vadd.f32 %v327, %v325
        %vm329 = vcmp.eq.s32.totalorder %v310, 1
        %v330 = vsel %vm329, %v315, %v314
        %vm331 = vcmp.eq.s32.totalorder %v310, 2
        %v332 = vsel %vm331, %v316, %v330
        %vm333 = vcmp.eq.s32.totalorder %v310, 3
        %v334 = vsel %vm333, %v317, %v332
        %v335 = vlog2.pop %v328
        %v336 = vmul.f32 %v335, 0.6931472
        %v337 = vsub.f32 %v334, %v336
        %v338 = vmul.f32 %v337, -1.0
        %s339 = sadd.s32 %s28, %s29
        %s340 = smul.u32 %s339, 1024
        %s341 = sadd.s32 %s340, 1024
        %p342 = scmp.le.s32.totalorder %s341, 256
        // Predicated region
        $region41: #{tpu_custom_call.1} parent=27 // pred_check
          %p343 = pneg %p342
        $region42: #{tpu_custom_call.1} parent=27 // pred_check_branch
          %345 = sbr.rel (%p343) target = $region44
        $region43: #{tpu_custom_call.1} parent=27 // pred_region
          %v346 = vld [vmem:[%s287] sm:$0xff]
          %v347 = vadd.f32 %v346, %v338
          %348 = vst [vmem:[%s287] sm:$0xff] %v347
        $region44: #{tpu_custom_call.1} parent=27 // pred_fallthru
          _
        %p349 = scmp.gt.s32.totalorder %s341, 256
        // Predicated region
        $region45: #{tpu_custom_call.1} parent=27 // pred_check
          %p350 = pneg %p349
        $region46: #{tpu_custom_call.1} parent=27 // pred_check_branch
          %352 = sbr.rel (%p350) target = $region48
        $region47: #{tpu_custom_call.1} parent=27 // pred_region
          %v353 = vlaneseq
          %v354 = vshrl.u32 %v353, 7
          %v355 = vlaneseq
          %v356 = vand.u32 %v355, 127
          %v357 = vmul.u32 %v354, 128
          %v358 = vstv %s340
          %v359 = vadd.s32 %v358, %v357
          %v360 = vadd.s32 %v359, %v356
          %v361 = vld [vmem:[%s287] sm:$0xff]
          %vm362 = vcmp.lt.s32.totalorder %v360, 256
          %v363 = vsel %vm362, %v338, 0.0
          %v364 = vadd.f32 %v361, %v363
          %365 = vst [vmem:[%s287] sm:$0xff] %v364
        $region48: #{tpu_custom_call.1} parent=27 // pred_fallthru
          _
        %s366 = sand.u32 %s119, 1
        %s367 = scalar_lea.sflag [#allocation4], %s366
        %s368 = sand.u32 %s119, 1
        %s369 = smul.addr %s368, 8
        %s370 = scalar_lea.vmem [#allocation7], %s369
        // Predicated region
        $region49: #{tpu_custom_call.1} parent=27 // pred_check
          %p371 = pneg %p129
        $region50: #{tpu_custom_call.1} parent=27 // pred_check_branch
          %373 = sbr.rel (%p371) target = $region52
        $region51: #{tpu_custom_call.1} parent=27 // pred_region
          %s374 = sadd.s32 %s27, %s28
          %376 = vsyncadd %s367, 0
          %s377 = smul.addr %s374, 8
          %s378 = scalar_lea.hbm %s2, %s377
          %s380 = sshll.u32 %s370, 4
          %s381 = int_to_ptr.vmem [resolvable:$true] %s380
          %s382 = sshll.u32 %s378, 4
          %s383 = int_to_ptr.hbm [resolvable:$true] %s382
          %385 = dma.vmem_to_hbm [thread:$0]  %s381, 128, %s383, %s367
        $region52: #{tpu_custom_call.1} parent=27 // pred_fallthru
          _
      $region28: #{tpu_custom_call.1} parent=5 // pred_fallthru
        _
      %p386 = scmp.le.s32.totalorder 2, %s17
      // Predicated region
      $region53: #{tpu_custom_call.1} parent=5 // pred_check
        %p387 = pneg %p386
      $region54: #{tpu_custom_call.1} parent=5 // pred_check_branch
        %389 = sbr.rel (%p387) target = $region56
      $region55: #{tpu_custom_call.1} parent=5 // pred_region
        %s390 = ssub.s32 %s17, 2
        // Predicated region
        $region57: #{tpu_custom_call.1} parent=55 // pred_check
          %p391 = pneg %p135
        $region58: #{tpu_custom_call.1} parent=55 // pred_check_branch
          %393 = sbr.rel (%p391) target = $region60
        $region59: #{tpu_custom_call.1} parent=55 // pred_region
          %s394 = sand.u32 %s120, 1
          %s395 = scalar_lea.sflag [#allocation4], %s394
          %s396 = sand.u32 %s120, 1
          %s397 = smul.addr %s396, 8
          %s398 = scalar_lea.vmem [#allocation7], %s397
          %400 = dma.done %s395, 128
        $region60: #{tpu_custom_call.1} parent=55 // pred_fallthru
          _
      $region56: #{tpu_custom_call.1} parent=5 // pred_fallthru
        _
    $region6: #{tpu_custom_call.1} parent=1 // loop_footer
      %s21 = sadd.s32 1, %s17
    $region7: #{tpu_custom_call.1} parent=1 // loop_footer_branch
      %16 = sbr.rel target = $region3
    $region8: #{tpu_custom_call.1} parent=1 // loop_exit
      _
    %401 = vsyncpa [#allocation3], 1
    %s402 = scalar_lea.sflag [#allocation3], 1
    %403 = vsyncpa %s402, 1
    %404 = vsyncpa [#allocation6], 1
    %s405 = scalar_lea.sflag [#allocation6], 1
    %406 = vsyncpa %s405, 1
    %407 = vsyncpa [#allocation4], 1
    %s408 = scalar_lea.sflag [#allocation4], 1
    %409 = vsyncpa %s408, 1

</llo_original>
